<compile_context>
chip_gen: v5e
topology: v5e:2x2
jax: 0.10.0
libtpu: 0.0.40
codegen_flags: <defaults>
</compile_context>

<pallas_src>
import numpy as np
import jax
import jax.numpy as jnp
from jax.experimental import pallas as pl
from jax.experimental.pallas import tpu as pltpu

# Full-accuracy f32 matmuls everywhere (kernel AND reference) so the numerics
# check is tight; negligible cost at this size on all TPU generations.
jax.config.update("jax_default_matmul_precision", "highest")
HIGHEST = jax.lax.Precision.HIGHEST

# --- problem dimensions (implied by decision_layer's 48-dim input) ---
B = 2                        # batch
H = W = 2                    # spatial size so Conv(3->16)+MaxPool(2) flattens to 16
P = H * W                    # 4 conv output positions (pooled over)
CIN, COUT = 3, 16
VIS_FLAT = CIN * H * W       # 12 flattened visual inputs

AUD_IN, AUD_OUT = 20, 16
TAC_IN, TAC_OUT = 5, 8
BIO_IN, BIO_OUT = 5, 8

# Stage-1 fused (conv-as-dense + block-diagonal sensory) matmul shapes.
FUSED_IN = VIS_FLAT + AUD_IN + TAC_IN + BIO_IN + 1    # 43 (+ constant-1 column)
CONV_COLS = P * COUT                                   # 64 (4 positions x 16 ch)
SENS_COLS = AUD_OUT + TAC_OUT + BIO_OUT + 1            # 33 (+ passthrough const)
FUSED_OUT = CONV_COLS + SENS_COLS                       # 97

COMB = COUT + AUD_OUT + TAC_OUT + BIO_OUT              # 48
HEAD_IN = COMB + 1                                     # 49 (+ constant-1 column)
DEC_HID, DEC_OUT = 32, 3
AMY_OUT = HIP_OUT = 16
# Heads output columns (lane-aligned order): [amy(16) | hip(16) | dec_hid(32) | const]
HEAD_OUT = AMY_OUT + HIP_OUT + DEC_HID + 1              # 65
DEC2_IN = DEC_HID + 1                                   # 33

# Lane-dense padded output: [amy(0:16) | hip(16:32) | dec(32:35) | pad].
OUT_PAD = 128
OUT_DEC = AMY_OUT + HIP_OUT                             # 32

# Packed parameter buffer: 8-aligned row offsets, 128 lanes, built once.
FUSED_OFF = 0                                           # rows 0:43
HEAD_OFF = 48                                           # rows 48:97
DEC2_OFF = 104                                          # rows 104:137
PARAM_ROWS = 144
PARAM_COLS = 128

# Activation-column / fused-weight offsets.
A_AUD = VIS_FLAT                  # 12
A_TAC = A_AUD + AUD_IN            # 32
A_BIO = A_TAC + TAC_IN            # 37
A_CONST = A_BIO + BIO_IN          # 42 (constant-1 column)
C_AUD = CONV_COLS                 # 64
C_TAC = C_AUD + AUD_OUT           # 80
C_BIO = C_TAC + TAC_OUT           # 88
C_CONST = C_BIO + BIO_OUT         # 96 (passthrough constant column)


def ai_brain_kernel(acts_ref, params_ref, out_ref):
    acts = acts_ref[...]                                                # (B, 43)
    fused_w = params_ref[FUSED_OFF:FUSED_OFF + FUSED_IN, 0:FUSED_OUT]   # (43, 97)
    head_w = params_ref[HEAD_OFF:HEAD_OFF + HEAD_IN, 0:HEAD_OUT]        # (49, 65)
    dec2_w = params_ref[DEC2_OFF:DEC2_OFF + DEC2_IN, 0:DEC_OUT]         # (33, 3)

    # MXU push 1: conv-as-dense (im2col folded into the weights at init) AND the
    # auditory/tactile/biometric block-diagonal in ONE matmul.  All biases are
    # folded via the constant-1 activation column; column 96 carries the constant
    # through for the later head-bias fold.
    fused = jnp.dot(acts, fused_w, precision=HIGHEST,
                    preferred_element_type=jnp.float32)                  # (B, 97)

    # Visual branch: ReLU + MaxPool2d(2) over the 2x2 map == max over the four
    # 16-lane position blocks (VPU/XLU work only, off the MXU path).
    conv = jnp.maximum(fused[:, 0:CONV_COLS], 0.0)                       # (B, 64)
    pooled = jnp.maximum(
        jnp.maximum(conv[:, 0:COUT], conv[:, COUT:2 * COUT]),
        jnp.maximum(conv[:, 2 * COUT:3 * COUT], conv[:, 3 * COUT:4 * COUT]))

    sens = fused[:, CONV_COLS:FUSED_OUT]                # (B, 33) = [aud|tac|bio|1]
    combined = jnp.concatenate([pooled, sens], axis=1)  # (B, 49), col 48 == 1

    # MXU push 2: all three heads at once; column order [amy | hip | dec_hid | 1]
    # makes the output store a lane-aligned 32-lane block.
    heads = jnp.dot(combined, head_w, precision=HIGHEST,
                    preferred_element_type=jnp.float32)                  # (B, 65)

    # MXU push 3: second decision layer.  ReLU keeps the constant-1 column
    # (relu(1) == 1), so dec_b2 is folded into the last row of dec2_w.
    dec_in = jnp.maximum(heads[:, OUT_DEC:HEAD_OUT], 0.0)                # (B, 33)
    dec = jnp.dot(dec_in, dec2_w, precision=HIGHEST,
                  preferred_element_type=jnp.float32)                    # (B, 3)

    # Lane-dense output: [amy | hip | dec | zero padding].
    out_ref[...] = jnp.zeros_like(out_ref)
    out_ref[:, 0:OUT_DEC] = heads[:, 0:OUT_DEC]
    out_ref[:, OUT_DEC:OUT_DEC + DEC_OUT] = dec


def build_conv_dense(conv_w_oihw):
    """Fold Conv2d(3->16, k=3, pad=1) on a 2x2 image into a dense (12, 64)
    matrix: one 16-channel column block per conv output position so MaxPool
    becomes a max over 16-lane blocks.  Built ONCE at init (numpy, eager)."""
    w = np.asarray(conv_w_oihw)                          # (COUT, CIN, 3, 3)
    m = np.zeros((VIS_FLAT, CONV_COLS), np.float32)
    for oy in range(H):
        for ox in range(W):
            pos = oy * W + ox
            for iy in range(H):
                for ix in range(W):
                    ky, kx = iy - oy + 1, ix - ox + 1    # always in 0..2 here
                    for ci in range(CIN):
                        row = ci * H * W + iy * W + ix
                        m[row, pos * COUT:(pos + 1) * COUT] = w[:, ci, ky, kx]
    return jnp.asarray(m)


def init_params(key):
    keys = jax.random.split(key, 16)
    n = lambda k, shape: jax.random.normal(k, shape, dtype=jnp.float32) * 0.1
    return dict(
        conv_w_oihw=n(keys[0], (COUT, CIN, 3, 3)),       # torch (O, I, kh, kw)
        conv_b=n(keys[1], (1, COUT)),
        aud_w=n(keys[2], (AUD_IN, AUD_OUT)), aud_b=n(keys[3], (1, AUD_OUT)),
        tac_w=n(keys[4], (TAC_IN, TAC_OUT)), tac_b=n(keys[5], (1, TAC_OUT)),
        bio_w=n(keys[6], (BIO_IN, BIO_OUT)), bio_b=n(keys[7], (1, BIO_OUT)),
        dec_w1=n(keys[8], (COMB, DEC_HID)),  dec_b1=n(keys[9], (1, DEC_HID)),
        dec_w2=n(keys[10], (DEC_HID, DEC_OUT)), dec_b2=n(keys[11], (1, DEC_OUT)),
        amy_w=n(keys[12], (COMB, AMY_OUT)), amy_b=n(keys[13], (1, AMY_OUT)),
        hip_w=n(keys[14], (COMB, HIP_OUT)), hip_b=n(keys[15], (1, HIP_OUT)),
    )


def pack_params(p):
    """Pack every weight/bias into one lane/sublane-aligned (144, 128) f32
    buffer (built once).  All biases are folded via constant-1 columns."""
    buf = jnp.zeros((PARAM_ROWS, PARAM_COLS), jnp.float32)

    # Stage-1 fused weight: conv-as-dense + block-diagonal sensory + biases.
    fw = jnp.zeros((FUSED_IN, FUSED_OUT), jnp.float32)
    fw = fw.at[0:VIS_FLAT, 0:CONV_COLS].set(build_conv_dense(p["conv_w_oihw"]))
    fw = fw.at[A_AUD:A_AUD + AUD_IN, C_AUD:C_AUD + AUD_OUT].set(p["aud_w"])
    fw = fw.at[A_TAC:A_TAC + TAC_IN, C_TAC:C_TAC + TAC_OUT].set(p["tac_w"])
    fw = fw.at[A_BIO:A_BIO + BIO_IN, C_BIO:C_BIO + BIO_OUT].set(p["bio_w"])
    fw = fw.at[A_CONST, 0:CONV_COLS].set(jnp.tile(p["conv_b"][0], P))
    fw = fw.at[A_CONST, C_AUD:C_AUD + AUD_OUT].set(p["aud_b"][0])
    fw = fw.at[A_CONST, C_TAC:C_TAC + TAC_OUT].set(p["tac_b"][0])
    fw = fw.at[A_CONST, C_BIO:C_BIO + BIO_OUT].set(p["bio_b"][0])
    fw = fw.at[A_CONST, C_CONST].set(1.0)       # constant passthrough column
    buf = buf.at[FUSED_OFF:FUSED_OFF + FUSED_IN, 0:FUSED_OUT].set(fw)

    # Fused heads weight: columns [amy | hip | dec_w1 | const]; biases in last row.
    hw = jnp.zeros((HEAD_IN, HEAD_OUT), jnp.float32)
    hw = hw.at[0:COMB, 0:AMY_OUT].set(p["amy_w"])
    hw = hw.at[0:COMB, AMY_OUT:OUT_DEC].set(p["hip_w"])
    hw = hw.at[0:COMB, OUT_DEC:OUT_DEC + DEC_HID].set(p["dec_w1"])
    hw = hw.at[COMB, 0:AMY_OUT].set(p["amy_b"][0])
    hw = hw.at[COMB, AMY_OUT:OUT_DEC].set(p["hip_b"][0])
    hw = hw.at[COMB, OUT_DEC:OUT_DEC + DEC_HID].set(p["dec_b1"][0])
    hw = hw.at[COMB, HEAD_OUT - 1].set(1.0)     # constant passthrough column
    buf = buf.at[HEAD_OFF:HEAD_OFF + HEAD_IN, 0:HEAD_OUT].set(hw)

    # Second decision layer weight with folded bias row.
    d2 = jnp.concatenate([p["dec_w2"], p["dec_b2"]], axis=0)       # (33, 3)
    buf = buf.at[DEC2_OFF:DEC2_OFF + DEC2_IN, 0:DEC_OUT].set(d2)
    return buf


@jax.jit
def ai_brain_forward(visual, auditory, tactile, biometric, packed_params):
    # Per-call XLA glue is just one reshape + one concat (im2col lives in the
    # packed parameters, built once at init).
    acts = jnp.concatenate(
        [visual.reshape(B, VIS_FLAT), auditory, tactile, biometric,
         jnp.ones((B, 1), jnp.float32)], axis=1)                      # (B, 43)

    vmem = pl.BlockSpec(memory_space=pltpu.MemorySpace.VMEM)
    flops = 2 * (B * FUSED_IN * FUSED_OUT + B * HEAD_IN * HEAD_OUT
                 + B * DEC2_IN * DEC_OUT)
    bytes_accessed = 4 * (B * FUSED_IN + PARAM_ROWS * PARAM_COLS + B * OUT_PAD)
    out = pl.pallas_call(
        ai_brain_kernel,
        out_shape=jax.ShapeDtypeStruct((B, OUT_PAD), jnp.float32),
        in_specs=[vmem, vmem],
        out_specs=vmem,
        compiler_params=pltpu.CompilerParams(vmem_limit_bytes=2 * 1024 * 1024),
        cost_estimate=pl.CostEstimate(flops=flops, transcendentals=0,
                                      bytes_accessed=bytes_accessed),
    )(acts, packed_params)

    dec = out[:, OUT_DEC:OUT_DEC + DEC_OUT]
    amy = out[:, 0:AMY_OUT]
    hip = out[:, AMY_OUT:OUT_DEC]
    return dec, amy, hip


def reference_forward(visual, auditory, tactile, biometric, params):
    """Pure-JAX reference mirroring the PyTorch forward, for validation."""
    conv = jax.lax.conv_general_dilated(
        visual, params["conv_w_oihw"], window_strides=(1, 1),
        padding=((1, 1), (1, 1)),
        dimension_numbers=("NCHW", "OIHW", "NCHW"), precision=HIGHEST)
    conv = conv + params["conv_b"].reshape(1, COUT, 1, 1)
    conv = jnp.maximum(conv, 0.0)
    pooled = jnp.max(conv.reshape(B, COUT, 1, 2, 1, 2), axis=(3, 5))
    vis = pooled.reshape(B, -1)
    dot = lambda a, w: jnp.dot(a, w, precision=HIGHEST)
    aud = dot(auditory, params["aud_w"]) + params["aud_b"]
    tac = dot(tactile, params["tac_w"]) + params["tac_b"]
    bio = dot(biometric, params["bio_w"]) + params["bio_b"]
    comb = jnp.concatenate([vis, aud, tac, bio], axis=1)
    hid = jnp.maximum(dot(comb, params["dec_w1"]) + params["dec_b1"], 0.0)
    dec = dot(hid, params["dec_w2"]) + params["dec_b2"]
    amy = dot(comb, params["amy_w"]) + params["amy_b"]
    hip = dot(comb, params["hip_w"]) + params["hip_b"]
    return dec, amy, hip


if __name__ == "__main__":
    key = jax.random.PRNGKey(0)
    kv, ka, kt, kb = jax.random.split(key, 4)
    visual = jax.random.normal(kv, (B, CIN, H, W), dtype=jnp.float32)
    auditory = jax.random.normal(ka, (B, AUD_IN), dtype=jnp.float32)
    tactile = jax.random.normal(kt, (B, TAC_IN), dtype=jnp.float32)
    biometric = jax.random.normal(kb, (B, BIO_IN), dtype=jnp.float32)

    params = init_params(jax.random.PRNGKey(42))
    packed_params = pack_params(params)

    outs = ai_brain_forward(visual, auditory, tactile, biometric, packed_params)
    outs = jax.block_until_ready(outs)

    refs = reference_forward(visual, auditory, tactile, biometric, params)
    for o, r in zip(outs, refs):
        assert o.shape == r.shape, (o.shape, r.shape)
        assert jnp.allclose(o, r, atol=2e-3, rtol=2e-3), (o, r)

    print("KERNEL_OK")
</pallas_src>

<mosaic_0001>
module attributes {stable_mosaic.version = 11 : i64} {
  func.func @ai_brain_kernel(%arg0: memref<2x43xf32, #tpu.memory_space<vmem>>, %arg1: memref<144x128xf32, #tpu.memory_space<vmem>>, %arg2: memref<2x128xf32, #tpu.memory_space<vmem>>) attributes {dimension_semantics = [], scalar_prefetch = 0 : i64, scratch_operands = 0 : i64, tpu.core_type = #tpu.core_type<tc>} {
    %c0 = arith.constant 0 : index
    %c0_0 = arith.constant 0 : index
    %0 = vector.load %arg0[%c0, %c0_0] : memref<2x43xf32, #tpu.memory_space<vmem>>, vector<2x43xf32>
    %c0_1 = arith.constant 0 : index
    %c0_2 = arith.constant 0 : index
    %1 = vector.load %arg1[%c0_1, %c0_2] : memref<144x128xf32, #tpu.memory_space<vmem>>, vector<43x97xf32>
    %c48 = arith.constant 48 : index
    %c0_3 = arith.constant 0 : index
    %2 = vector.load %arg1[%c48, %c0_3] : memref<144x128xf32, #tpu.memory_space<vmem>>, vector<49x65xf32>
    %c104 = arith.constant 104 : index
    %c0_4 = arith.constant 0 : index
    %3 = vector.load %arg1[%c104, %c0_4] : memref<144x128xf32, #tpu.memory_space<vmem>>, vector<33x3xf32>
    %cst = arith.constant dense<0.000000e+00> : vector<2x97xf32>
    %4 = tpu.matmul %0, %1, %cst {dimension_numbers = #tpu.dot_dimension_numbers<[1], [0], [0], [1], [0, 0, 1, 1], [], []>, precision = #tpu.contract_precision<fp32>} : vector<2x43xf32>, vector<43x97xf32>, vector<2x97xf32> -> vector<2x97xf32>
    %5 = vector.extract_strided_slice %4 {offsets = [0, 0], sizes = [2, 64], strides = [1, 1]} : vector<2x97xf32> to vector<2x64xf32>
    %cst_5 = arith.constant 0.000000e+00 : f32
    %6 = vector.broadcast %cst_5 : f32 to vector<2x64xf32>
    %7 = arith.maximumf %5, %6 : vector<2x64xf32>
    %8 = vector.extract_strided_slice %7 {offsets = [0, 0], sizes = [2, 16], strides = [1, 1]} : vector<2x64xf32> to vector<2x16xf32>
    %9 = vector.extract_strided_slice %7 {offsets = [0, 16], sizes = [2, 16], strides = [1, 1]} : vector<2x64xf32> to vector<2x16xf32>
    %10 = arith.maximumf %8, %9 : vector<2x16xf32>
    %11 = vector.extract_strided_slice %7 {offsets = [0, 32], sizes = [2, 16], strides = [1, 1]} : vector<2x64xf32> to vector<2x16xf32>
    %12 = vector.extract_strided_slice %7 {offsets = [0, 48], sizes = [2, 16], strides = [1, 1]} : vector<2x64xf32> to vector<2x16xf32>
    %13 = arith.maximumf %11, %12 : vector<2x16xf32>
    %14 = arith.maximumf %10, %13 : vector<2x16xf32>
    %15 = vector.extract_strided_slice %4 {offsets = [0, 64], sizes = [2, 33], strides = [1, 1]} : vector<2x97xf32> to vector<2x33xf32>
    %16 = tpu.concatenate %14, %15 in 1 : vector<2x16xf32>, vector<2x33xf32> -> vector<2x49xf32>
    %cst_6 = arith.constant dense<0.000000e+00> : vector<2x65xf32>
    %17 = tpu.matmul %16, %2, %cst_6 {dimension_numbers = #tpu.dot_dimension_numbers<[1], [0], [0], [1], [0, 0, 1, 1], [], []>, precision = #tpu.contract_precision<fp32>} : vector<2x49xf32>, vector<49x65xf32>, vector<2x65xf32> -> vector<2x65xf32>
    %18 = vector.extract_strided_slice %17 {offsets = [0, 32], sizes = [2, 33], strides = [1, 1]} : vector<2x65xf32> to vector<2x33xf32>
    %cst_7 = arith.constant 0.000000e+00 : f32
    %19 = vector.broadcast %cst_7 : f32 to vector<2x33xf32>
    %20 = arith.maximumf %18, %19 : vector<2x33xf32>
    %cst_8 = arith.constant dense<0.000000e+00> : vector<2x3xf32>
    %21 = tpu.matmul %20, %3, %cst_8 {dimension_numbers = #tpu.dot_dimension_numbers<[1], [0], [0], [1], [0, 0, 1, 1], [], []>, precision = #tpu.contract_precision<fp32>} : vector<2x33xf32>, vector<33x3xf32>, vector<2x3xf32> -> vector<2x3xf32>
    %cst_9 = arith.constant 0.000000e+00 : f32
    %22 = vector.broadcast %cst_9 : f32 to vector<2x128xf32>
    %c0_10 = arith.constant 0 : index
    %c0_11 = arith.constant 0 : index
    %23 = vector.load %arg2[%c0_10, %c0_11] : memref<2x128xf32, #tpu.memory_space<vmem>>, vector<2x128xf32>
    tpu.vector_store %arg2[%c0_10, %c0_11], %22 {strides = array<i32>} : memref<2x128xf32, #tpu.memory_space<vmem>>, vector<2x128xf32>,
    %24 = vector.extract_strided_slice %17 {offsets = [0, 0], sizes = [2, 32], strides = [1, 1]} : vector<2x65xf32> to vector<2x32xf32>
    %c0_12 = arith.constant 0 : index
    %c0_13 = arith.constant 0 : index
    %25 = vector.load %arg2[%c0_12, %c0_13] : memref<2x128xf32, #tpu.memory_space<vmem>>, vector<2x32xf32>
    tpu.vector_store %arg2[%c0_12, %c0_13], %24 {strides = array<i32>} : memref<2x128xf32, #tpu.memory_space<vmem>>, vector<2x32xf32>,
    %c0_14 = arith.constant 0 : index
    %c32 = arith.constant 32 : index
    %26 = vector.load %arg2[%c0_14, %c32] : memref<2x128xf32, #tpu.memory_space<vmem>>, vector<2x3xf32>
    tpu.vector_store %arg2[%c0_14, %c32], %21 {strides = array<i32>} : memref<2x128xf32, #tpu.memory_space<vmem>>, vector<2x3xf32>,
    return
  }
}

</mosaic_0001>

<llo_original>
// kernel: ai_brain_forward.1
$region0: #{ai_brain_forward.1}
  #allocation0 [shape = 'u32[]', space=smem, size = 0x4, offset = 0x4, fixed_abs, tag = 'smem constant byte address 0x4 - core index']
  #allocation1 [shape = 'u32[72,128]{1,0:T(1,128)}', space=vmem, size = 0x9000, scoped, tag = 'internal scratch']
  %s0 = inlined_call_operand.vmem [shape: f32[2,43], index: 0, kind: input, shape index: {}]
  %s1 = inlined_call_operand.hbm [shape: f32[144,128], index: 1, kind: input, shape index: {}]
  %s2 = inlined_call_operand.vmem [shape: f32[2,128], index: 2, kind: output, shape index: {}]
  %s3 = sld [smem:[#allocation0]]
  $region22: #{ai_brain_forward.1} parent=0
    _
  %s5 = ssub.s32 1, %s3
  %s6 = scalar_select 0, %s5, %s3
  $region1: #{ai_brain_forward.1} parent=0
    #allocation2 [shape = 'u8[73728]{0}', space=vmem, size = 0x12000, scoped, tag = 'input window, operand 1, single buffered']
    #allocation3 [shape = 's32[1]{0}', space=sflag, size = 0x4, scoped, tag = 'scoped memory for ai_brain_forward.1']
    %7 = vsyncpa [#allocation3], 0
    // Predicated region
    $region2: #{ai_brain_forward.1} parent=1 // pred_check
      _
    $region3: #{ai_brain_forward.1} parent=1 // pred_check_branch
      %9 = sbr.rel (0) target = $region5
    $region4: #{ai_brain_forward.1} parent=1 // pred_region
      _
    $region5: #{ai_brain_forward.1} parent=1 // pred_fallthru
      _
    // Predicated region
    $region6: #{ai_brain_forward.1} parent=1 // pred_check
      _
    $region7: #{ai_brain_forward.1} parent=1 // pred_check_branch
      %11 = sbr.rel (0) target = $region9
    $region8: #{ai_brain_forward.1} parent=1 // pred_region
      %13 = vsyncadd [#allocation3], 0
      %s14 = sshll.u32 %s1, 4
      %s15 = int_to_ptr.hbm [resolvable:$true] %s14
      %s16 = sshll.u32 [#allocation2], 4
      %s17 = int_to_ptr.vmem [resolvable:$true] %s16
      %22 = dma.hbm_to_vmem [thread:$0]  %s15, 2304, %s17, [#allocation3], 128, 128, 8
    $region9: #{ai_brain_forward.1} parent=1 // pred_fallthru
      _
    // Predicated region
    $region10: #{ai_brain_forward.1} parent=1 // pred_check
      _
    $region11: #{ai_brain_forward.1} parent=1 // pred_check_branch
      %24 = sbr.rel (0) target = $region13
    $region12: #{ai_brain_forward.1} parent=1 // pred_region
      %26 = dma.done [#allocation3], 2304
    $region13: #{ai_brain_forward.1} parent=1 // pred_fallthru
      _
    %v27 = vld [vmem:[%s0] sm:$0x3]
    %v28 = vld [vmem:[#allocation2] sm:$0xff]
    %v29 = vld [vmem:[#allocation2 + $0x8] sm:$0xff]
    %v30 = vld [vmem:[#allocation2 + $0x10] sm:$0xff]
    %v31 = vld [vmem:[#allocation2 + $0x18] sm:$0xff]
    %v32 = vld [vmem:[#allocation2 + $0x20] sm:$0xff]
    %v33 = vld [vmem:[#allocation2 + $0x28] sm:$0x7]
    %v34 = vld [vmem:[#allocation2 + $0x30] sm:$0xff]
    %v35 = vld [vmem:[#allocation2 + $0x38] sm:$0xff]
    %v36 = vld [vmem:[#allocation2 + $0x40] sm:$0xff]
    %v37 = vld [vmem:[#allocation2 + $0x48] sm:$0xff]
    %v38 = vld [vmem:[#allocation2 + $0x50] sm:$0xff]
    %v39 = vld [vmem:[#allocation2 + $0x58] sm:$0xff]
    %v40 = vld [vmem:[#allocation2 + $0x60] sm:$0x1]
    %v41 = vld [vmem:[#allocation2 + $0x68] sm:$0xff]
    %v42 = vld [vmem:[#allocation2 + $0x70] sm:$0xff]
    %v43 = vld [vmem:[#allocation2 + $0x78] sm:$0xff]
    %v44 = vld [vmem:[#allocation2 + $0x80] sm:$0xff]
    %v45 = vld [vmem:[#allocation2 + $0x88] sm:$0x1]
    %vm46 = vcmask 351232
    %v48 = vsel %vm46, %v27, 0
    %vm50 = vcmask 1042432
    %v52 = vsel %vm50, %v33, 0
    %54 = vmatpush.msra.mxu0 0.0
    %55 = vmatpush.msra.mxu0 0.0
    %56 = vmatpush.msra.mxu0 0.0
    %57 = vmatpush.msra.mxu0 0.0
    %58 = vmatpush.msra.mxu0 0.0
    %59 = vmatpush.msra.mxu0 0.0
    %60 = vmatpush.msra.mxu0 0.0
    %61 = vmatpush.msra.mxu0 0.0
    %62 = vmatpush.msra.mxu0 0.0
    %63 = vmatpush.msra.mxu0 0.0
    %v64 = vand.u32 %v52, 4294901760
    %65 = vmatpush.msra.mxu0 %v64
    %v66 = vand.u32 %v32, 4294901760
    %67 = vmatpush.msra.mxu0 %v66
    %v68 = vand.u32 %v31, 4294901760
    %69 = vmatpush.msra.mxu0 %v68
    %v70 = vand.u32 %v30, 4294901760
    %71 = vmatpush.msra.mxu0 %v70
    %v72 = vand.u32 %v29, 4294901760
    %73 = vmatpush.msra.mxu0 %v72
    %v74 = vand.u32 %v28, 4294901760
    %75 = vmatpush.msra.mxu0 %v74
    %v76 = vand.u32 %v48, 4294901760
    %v77 = vsub.f32 %v48, %v76
    %v78 = vand.u32 %v77, 4294901760
    %v79 = vsub.f32 %v77, %v78
    %v80 = vand.u32 %v79, 4294901760
    %81 = vmatmul.f32.gmra.mxu0 %v80
    %v82 = vpop.f32.mrf.mxu0
    %v83 = vadd.f32 0.0, %v82
    %84 = vdwg.mxu0
    %85 = vmatpush.msra.mxu0 0.0
    %86 = vmatpush.msra.mxu0 0.0
    %87 = vmatpush.msra.mxu0 0.0
    %88 = vmatpush.msra.mxu0 0.0
    %89 = vmatpush.msra.mxu0 0.0
    %90 = vmatpush.msra.mxu0 0.0
    %91 = vmatpush.msra.mxu0 0.0
    %92 = vmatpush.msra.mxu0 0.0
    %93 = vmatpush.msra.mxu0 0.0
    %94 = vmatpush.msra.mxu0 0.0
    %v95 = vand.u32 %v52, 4294901760
    %v96 = vsub.f32 %v52, %v95
    %v97 = vand.u32 %v96, 4294901760
    %v98 = vsub.f32 %v96, %v97
    %v99 = vand.u32 %v98, 4294901760
    %100 = vmatpush.msra.mxu0 %v99
    %v101 = vand.u32 %v32, 4294901760
    %v102 = vsub.f32 %v32, %v101
    %v103 = vand.u32 %v102, 4294901760
    %v104 = vsub.f32 %v102, %v103
    %v105 = vand.u32 %v104, 4294901760
    %106 = vmatpush.msra.mxu0 %v105
    %v107 = vand.u32 %v31, 4294901760
    %v108 = vsub.f32 %v31, %v107
    %v109 = vand.u32 %v108, 4294901760
    %v110 = vsub.f32 %v108, %v109
    %v111 = vand.u32 %v110, 4294901760
    %112 = vmatpush.msra.mxu0 %v111
    %v113 = vand.u32 %v30, 4294901760
    %v114 = vsub.f32 %v30, %v113
    %v115 = vand.u32 %v114, 4294901760
    %v116 = vsub.f32 %v114, %v115
    %v117 = vand.u32 %v116, 4294901760
    %118 = vmatpush.msra.mxu0 %v117
    %v119 = vand.u32 %v29, 4294901760
    %v120 = vsub.f32 %v29, %v119
    %v121 = vand.u32 %v120, 4294901760
    %v122 = vsub.f32 %v120, %v121
    %v123 = vand.u32 %v122, 4294901760
    %124 = vmatpush.msra.mxu0 %v123
    %v125 = vand.u32 %v28, 4294901760
    %v126 = vsub.f32 %v28, %v125
    %v127 = vand.u32 %v126, 4294901760
    %v128 = vsub.f32 %v126, %v127
    %v129 = vand.u32 %v128, 4294901760
    %130 = vmatpush.msra.mxu0 %v129
    %v131 = vand.u32 %v48, 4294901760
    %132 = vmatmul.f32.gmra.mxu0 %v131
    %v133 = vpop.f32.mrf.mxu0
    %v134 = vadd.f32 %v83, %v133
    %135 = vdwg.mxu0
    %136 = vmatpush.msra.mxu0 0.0
    %137 = vmatpush.msra.mxu0 0.0
    %138 = vmatpush.msra.mxu0 0.0
    %139 = vmatpush.msra.mxu0 0.0
    %140 = vmatpush.msra.mxu0 0.0
    %141 = vmatpush.msra.mxu0 0.0
    %142 = vmatpush.msra.mxu0 0.0
    %143 = vmatpush.msra.mxu0 0.0
    %144 = vmatpush.msra.mxu0 0.0
    %145 = vmatpush.msra.mxu0 0.0
    %v146 = vand.u32 %v52, 4294901760
    %v147 = vsub.f32 %v52, %v146
    %148 = vmatpush.msra.mxu0 %v147
    %v149 = vand.u32 %v32, 4294901760
    %v150 = vsub.f32 %v32, %v149
    %151 = vmatpush.msra.mxu0 %v150
    %v152 = vand.u32 %v31, 4294901760
    %v153 = vsub.f32 %v31, %v152
    %154 = vmatpush.msra.mxu0 %v153
    %v155 = vand.u32 %v30, 4294901760
    %v156 = vsub.f32 %v30, %v155
    %157 = vmatpush.msra.mxu0 %v156
    %v158 = vand.u32 %v29, 4294901760
    %v159 = vsub.f32 %v29, %v158
    %160 = vmatpush.msra.mxu0 %v159
    %v161 = vand.u32 %v28, 4294901760
    %v162 = vsub.f32 %v28, %v161
    %163 = vmatpush.msra.mxu0 %v162
    %v164 = vand.u32 %v48, 4294901760
    %v165 = vsub.f32 %v48, %v164
    %166 = vmatmul.f32.gmra.mxu0 %v165
    %v167 = vpop.f32.mrf.mxu0
    %v168 = vadd.f32 %v134, %v167
    %169 = vdwg.mxu0
    %170 = vmatpush.msra.mxu0 0.0
    %171 = vmatpush.msra.mxu0 0.0
    %172 = vmatpush.msra.mxu0 0.0
    %173 = vmatpush.msra.mxu0 0.0
    %174 = vmatpush.msra.mxu0 0.0
    %175 = vmatpush.msra.mxu0 0.0
    %176 = vmatpush.msra.mxu0 0.0
    %177 = vmatpush.msra.mxu0 0.0
    %178 = vmatpush.msra.mxu0 0.0
    %179 = vmatpush.msra.mxu0 0.0
    %v180 = vand.u32 %v52, 4294901760
    %181 = vmatpush.msra.mxu0 %v180
    %v182 = vand.u32 %v32, 4294901760
    %183 = vmatpush.msra.mxu0 %v182
    %v184 = vand.u32 %v31, 4294901760
    %185 = vmatpush.msra.mxu0 %v184
    %v186 = vand.u32 %v30, 4294901760
    %187 = vmatpush.msra.mxu0 %v186
    %v188 = vand.u32 %v29, 4294901760
    %189 = vmatpush.msra.mxu0 %v188
    %v190 = vand.u32 %v28, 4294901760
    %191 = vmatpush.msra.mxu0 %v190
    %v192 = vand.u32 %v48, 4294901760
    %v193 = vsub.f32 %v48, %v192
    %v194 = vand.u32 %v193, 4294901760
    %195 = vmatmul.f32.gmra.mxu0 %v194
    %v196 = vpop.f32.mrf.mxu0
    %v197 = vadd.f32 %v168, %v196
    %198 = vdwg.mxu0
    %199 = vmatpush.msra.mxu0 0.0
    %200 = vmatpush.msra.mxu0 0.0
    %201 = vmatpush.msra.mxu0 0.0
    %202 = vmatpush.msra.mxu0 0.0
    %203 = vmatpush.msra.mxu0 0.0
    %204 = vmatpush.msra.mxu0 0.0
    %205 = vmatpush.msra.mxu0 0.0
    %206 = vmatpush.msra.mxu0 0.0
    %207 = vmatpush.msra.mxu0 0.0
    %208 = vmatpush.msra.mxu0 0.0
    %v209 = vand.u32 %v52, 4294901760
    %v210 = vsub.f32 %v52, %v209
    %v211 = vand.u32 %v210, 4294901760
    %212 = vmatpush.msra.mxu0 %v211
    %v213 = vand.u32 %v32, 4294901760
    %v214 = vsub.f32 %v32, %v213
    %v215 = vand.u32 %v214, 4294901760
    %216 = vmatpush.msra.mxu0 %v215
    %v217 = vand.u32 %v31, 4294901760
    %v218 = vsub.f32 %v31, %v217
    %v219 = vand.u32 %v218, 4294901760
    %220 = vmatpush.msra.mxu0 %v219
    %v221 = vand.u32 %v30, 4294901760
    %v222 = vsub.f32 %v30, %v221
    %v223 = vand.u32 %v222, 4294901760
    %224 = vmatpush.msra.mxu0 %v223
    %v225 = vand.u32 %v29, 4294901760
    %v226 = vsub.f32 %v29, %v225
    %v227 = vand.u32 %v226, 4294901760
    %228 = vmatpush.msra.mxu0 %v227
    %v229 = vand.u32 %v28, 4294901760
    %v230 = vsub.f32 %v28, %v229
    %v231 = vand.u32 %v230, 4294901760
    %232 = vmatpush.msra.mxu0 %v231
    %v233 = vand.u32 %v48, 4294901760
    %234 = vmatmul.f32.gmra.mxu0 %v233
    %v235 = vpop.f32.mrf.mxu0
    %v236 = vadd.f32 %v197, %v235
    %237 = vdwg.mxu0
    %238 = vmatpush.msra.mxu0 0.0
    %239 = vmatpush.msra.mxu0 0.0
    %240 = vmatpush.msra.mxu0 0.0
    %241 = vmatpush.msra.mxu0 0.0
    %242 = vmatpush.msra.mxu0 0.0
    %243 = vmatpush.msra.mxu0 0.0
    %244 = vmatpush.msra.mxu0 0.0
    %245 = vmatpush.msra.mxu0 0.0
    %246 = vmatpush.msra.mxu0 0.0
    %247 = vmatpush.msra.mxu0 0.0
    %v248 = vand.u32 %v52, 4294901760
    %249 = vmatpush.msra.mxu0 %v248
    %v250 = vand.u32 %v32, 4294901760
    %251 = vmatpush.msra.mxu0 %v250
    %v252 = vand.u32 %v31, 4294901760
    %253 = vmatpush.msra.mxu0 %v252
    %v254 = vand.u32 %v30, 4294901760
    %255 = vmatpush.msra.mxu0 %v254
    %v256 = vand.u32 %v29, 4294901760
    %257 = vmatpush.msra.mxu0 %v256
    %v258 = vand.u32 %v28, 4294901760
    %259 = vmatpush.msra.mxu0 %v258
    %v260 = vand.u32 %v48, 4294901760
    %261 = vmatmul.f32.gmra.mxu0 %v260
    %v262 = vpop.f32.mrf.mxu0
    %v263 = vadd.f32 %v236, %v262
    %264 = vdwg.mxu0
    %v265 = vmax.f32 %v263, 0.0
    %267 = vrot.lane.b32.xlu0 %v265, 112
    %v268 = vpop.permute.xlu0 %267
    %v270 = vmax.f32 %v265, %v268
    %272 = vrot.lane.b32.xlu0 %v270, 96
    %v273 = vpop.permute.xlu0 %272
    %v275 = vmax.f32 %v270, %v273
    %277 = vrot.lane.b32.xlu0 %v263, 80
    %v278 = vpop.permute.xlu0 %277
    %vm280 = vcmask 130048
    %v281 = vsel %vm280, %v275, %v278
    %vm282 = vcmask 400384
    %v284 = vsel %vm282, %v281, 0
    %vm286 = vcmask 1040384
    %v288 = vsel %vm286, %v40, 0
    %290 = vmatpush.msra.mxu0 0.0
    %291 = vmatpush.msra.mxu0 0.0
    %292 = vmatpush.msra.mxu0 0.0
    %293 = vmatpush.msra.mxu0 0.0
    %294 = vmatpush.msra.mxu0 0.0
    %295 = vmatpush.msra.mxu0 0.0
    %296 = vmatpush.msra.mxu0 0.0
    %297 = vmatpush.msra.mxu0 0.0
    %298 = vmatpush.msra.mxu0 0.0
    %v299 = vand.u32 %v288, 4294901760
    %300 = vmatpush.msra.mxu0 %v299
    %v301 = vand.u32 %v39, 4294901760
    %302 = vmatpush.msra.mxu0 %v301
    %v303 = vand.u32 %v38, 4294901760
    %304 = vmatpush.msra.mxu0 %v303
    %v305 = vand.u32 %v37, 4294901760
    %306 = vmatpush.msra.mxu0 %v305
    %v307 = vand.u32 %v36, 4294901760
    %308 = vmatpush.msra.mxu0 %v307
    %v309 = vand.u32 %v35, 4294901760
    %310 = vmatpush.msra.mxu0 %v309
    %v311 = vand.u32 %v34, 4294901760
    %312 = vmatpush.msra.mxu0 %v311
    %v313 = vand.u32 %v284, 4294901760
    %v314 = vsub.f32 %v284, %v313
    %v315 = vand.u32 %v314, 4294901760
    %v316 = vsub.f32 %v314, %v315
    %v317 = vand.u32 %v316, 4294901760
    %318 = vmatmul.f32.gmra.mxu0 %v317
    %v319 = vpop.f32.mrf.mxu0
    %v320 = vadd.f32 0.0, %v319
    %321 = vdwg.mxu0
    %322 = vmatpush.msra.mxu0 0.0
    %323 = vmatpush.msra.mxu0 0.0
    %324 = vmatpush.msra.mxu0 0.0
    %325 = vmatpush.msra.mxu0 0.0
    %326 = vmatpush.msra.mxu0 0.0
    %327 = vmatpush.msra.mxu0 0.0
    %328 = vmatpush.msra.mxu0 0.0
    %329 = vmatpush.msra.mxu0 0.0
    %330 = vmatpush.msra.mxu0 0.0
    %v331 = vand.u32 %v288, 4294901760
    %v332 = vsub.f32 %v288, %v331
    %v333 = vand.u32 %v332, 4294901760
    %v334 = vsub.f32 %v332, %v333
    %v335 = vand.u32 %v334, 4294901760
    %336 = vmatpush.msra.mxu0 %v335
    %v337 = vand.u32 %v39, 4294901760
    %v338 = vsub.f32 %v39, %v337
    %v339 = vand.u32 %v338, 4294901760
    %v340 = vsub.f32 %v338, %v339
    %v341 = vand.u32 %v340, 4294901760
    %342 = vmatpush.msra.mxu0 %v341
    %v343 = vand.u32 %v38, 4294901760
    %v344 = vsub.f32 %v38, %v343
    %v345 = vand.u32 %v344, 4294901760
    %v346 = vsub.f32 %v344, %v345
    %v347 = vand.u32 %v346, 4294901760
    %348 = vmatpush.msra.mxu0 %v347
    %v349 = vand.u32 %v37, 4294901760
    %v350 = vsub.f32 %v37, %v349
    %v351 = vand.u32 %v350, 4294901760
    %v352 = vsub.f32 %v350, %v351
    %v353 = vand.u32 %v352, 4294901760
    %354 = vmatpush.msra.mxu0 %v353
    %v355 = vand.u32 %v36, 4294901760
    %v356 = vsub.f32 %v36, %v355
    %v357 = vand.u32 %v356, 4294901760
    %v358 = vsub.f32 %v356, %v357
    %v359 = vand.u32 %v358, 4294901760
    %360 = vmatpush.msra.mxu0 %v359
    %v361 = vand.u32 %v35, 4294901760
    %v362 = vsub.f32 %v35, %v361
    %v363 = vand.u32 %v362, 4294901760
    %v364 = vsub.f32 %v362, %v363
    %v365 = vand.u32 %v364, 4294901760
    %366 = vmatpush.msra.mxu0 %v365
    %v367 = vand.u32 %v34, 4294901760
    %v368 = vsub.f32 %v34, %v367
    %v369 = vand.u32 %v368, 4294901760
    %v370 = vsub.f32 %v368, %v369
    %v371 = vand.u32 %v370, 4294901760
    %372 = vmatpush.msra.mxu0 %v371
    %v373 = vand.u32 %v284, 4294901760
    %374 = vmatmul.f32.gmra.mxu0 %v373
    %v375 = vpop.f32.mrf.mxu0
    %v376 = vadd.f32 %v320, %v375
    %377 = vdwg.mxu0
    %378 = vmatpush.msra.mxu0 0.0
    %379 = vmatpush.msra.mxu0 0.0
    %380 = vmatpush.msra.mxu0 0.0
    %381 = vmatpush.msra.mxu0 0.0
    %382 = vmatpush.msra.mxu0 0.0
    %383 = vmatpush.msra.mxu0 0.0
    %384 = vmatpush.msra.mxu0 0.0
    %385 = vmatpush.msra.mxu0 0.0
    %386 = vmatpush.msra.mxu0 0.0
    %v387 = vand.u32 %v288, 4294901760
    %v388 = vsub.f32 %v288, %v387
    %389 = vmatpush.msra.mxu0 %v388
    %v390 = vand.u32 %v39, 4294901760
    %v391 = vsub.f32 %v39, %v390
    %392 = vmatpush.msra.mxu0 %v391
    %v393 = vand.u32 %v38, 4294901760
    %v394 = vsub.f32 %v38, %v393
    %395 = vmatpush.msra.mxu0 %v394
    %v396 = vand.u32 %v37, 4294901760
    %v397 = vsub.f32 %v37, %v396
    %398 = vmatpush.msra.mxu0 %v397
    %v399 = vand.u32 %v36, 4294901760
    %v400 = vsub.f32 %v36, %v399
    %401 = vmatpush.msra.mxu0 %v400
    %v402 = vand.u32 %v35, 4294901760
    %v403 = vsub.f32 %v35, %v402
    %404 = vmatpush.msra.mxu0 %v403
    %v405 = vand.u32 %v34, 4294901760
    %v406 = vsub.f32 %v34, %v405
    %407 = vmatpush.msra.mxu0 %v406
    %v408 = vand.u32 %v284, 4294901760
    %v409 = vsub.f32 %v284, %v408
    %410 = vmatmul.f32.gmra.mxu0 %v409
    %v411 = vpop.f32.mrf.mxu0
    %v412 = vadd.f32 %v376, %v411
    %413 = vdwg.mxu0
    %414 = vmatpush.msra.mxu0 0.0
    %415 = vmatpush.msra.mxu0 0.0
    %416 = vmatpush.msra.mxu0 0.0
    %417 = vmatpush.msra.mxu0 0.0
    %418 = vmatpush.msra.mxu0 0.0
    %419 = vmatpush.msra.mxu0 0.0
    %420 = vmatpush.msra.mxu0 0.0
    %421 = vmatpush.msra.mxu0 0.0
    %422 = vmatpush.msra.mxu0 0.0
    %v423 = vand.u32 %v288, 4294901760
    %424 = vmatpush.msra.mxu0 %v423
    %v425 = vand.u32 %v39, 4294901760
    %426 = vmatpush.msra.mxu0 %v425
    %v427 = vand.u32 %v38, 4294901760
    %428 = vmatpush.msra.mxu0 %v427
    %v429 = vand.u32 %v37, 4294901760
    %430 = vmatpush.msra.mxu0 %v429
    %v431 = vand.u32 %v36, 4294901760
    %432 = vmatpush.msra.mxu0 %v431
    %v433 = vand.u32 %v35, 4294901760
    %434 = vmatpush.msra.mxu0 %v433
    %v435 = vand.u32 %v34, 4294901760
    %436 = vmatpush.msra.mxu0 %v435
    %v437 = vand.u32 %v284, 4294901760
    %v438 = vsub.f32 %v284, %v437
    %v439 = vand.u32 %v438, 4294901760
    %440 = vmatmul.f32.gmra.mxu0 %v439
    %v441 = vpop.f32.mrf.mxu0
    %v442 = vadd.f32 %v412, %v441
    %443 = vdwg.mxu0
    %444 = vmatpush.msra.mxu0 0.0
    %445 = vmatpush.msra.mxu0 0.0
    %446 = vmatpush.msra.mxu0 0.0
    %447 = vmatpush.msra.mxu0 0.0
    %448 = vmatpush.msra.mxu0 0.0
    %449 = vmatpush.msra.mxu0 0.0
    %450 = vmatpush.msra.mxu0 0.0
    %451 = vmatpush.msra.mxu0 0.0
    %452 = vmatpush.msra.mxu0 0.0
    %v453 = vand.u32 %v288, 4294901760
    %v454 = vsub.f32 %v288, %v453
    %v455 = vand.u32 %v454, 4294901760
    %456 = vmatpush.msra.mxu0 %v455
    %v457 = vand.u32 %v39, 4294901760
    %v458 = vsub.f32 %v39, %v457
    %v459 = vand.u32 %v458, 4294901760
    %460 = vmatpush.msra.mxu0 %v459
    %v461 = vand.u32 %v38, 4294901760
    %v462 = vsub.f32 %v38, %v461
    %v463 = vand.u32 %v462, 4294901760
    %464 = vmatpush.msra.mxu0 %v463
    %v465 = vand.u32 %v37, 4294901760
    %v466 = vsub.f32 %v37, %v465
    %v467 = vand.u32 %v466, 4294901760
    %468 = vmatpush.msra.mxu0 %v467
    %v469 = vand.u32 %v36, 4294901760
    %v470 = vsub.f32 %v36, %v469
    %v471 = vand.u32 %v470, 4294901760
    %472 = vmatpush.msra.mxu0 %v471
    %v473 = vand.u32 %v35, 4294901760
    %v474 = vsub.f32 %v35, %v473
    %v475 = vand.u32 %v474, 4294901760
    %476 = vmatpush.msra.mxu0 %v475
    %v477 = vand.u32 %v34, 4294901760
    %v478 = vsub.f32 %v34, %v477
    %v479 = vand.u32 %v478, 4294901760
    %480 = vmatpush.msra.mxu0 %v479
    %v481 = vand.u32 %v284, 4294901760
    %482 = vmatmul.f32.gmra.mxu0 %v481
    %v483 = vpop.f32.mrf.mxu0
    %v484 = vadd.f32 %v442, %v483
    %485 = vdwg.mxu0
    %486 = vmatpush.msra.mxu0 0.0
    %487 = vmatpush.msra.mxu0 0.0
    %488 = vmatpush.msra.mxu0 0.0
    %489 = vmatpush.msra.mxu0 0.0
    %490 = vmatpush.msra.mxu0 0.0
    %491 = vmatpush.msra.mxu0 0.0
    %492 = vmatpush.msra.mxu0 0.0
    %493 = vmatpush.msra.mxu0 0.0
    %494 = vmatpush.msra.mxu0 0.0
    %v495 = vand.u32 %v288, 4294901760
    %496 = vmatpush.msra.mxu0 %v495
    %v497 = vand.u32 %v39, 4294901760
    %498 = vmatpush.msra.mxu0 %v497
    %v499 = vand.u32 %v38, 4294901760
    %500 = vmatpush.msra.mxu0 %v499
    %v501 = vand.u32 %v37, 4294901760
    %502 = vmatpush.msra.mxu0 %v501
    %v503 = vand.u32 %v36, 4294901760
    %504 = vmatpush.msra.mxu0 %v503
    %v505 = vand.u32 %v35, 4294901760
    %506 = vmatpush.msra.mxu0 %v505
    %v507 = vand.u32 %v34, 4294901760
    %508 = vmatpush.msra.mxu0 %v507
    %v509 = vand.u32 %v284, 4294901760
    %510 = vmatmul.f32.gmra.mxu0 %v509
    %v511 = vpop.f32.mrf.mxu0
    %v512 = vadd.f32 %v484, %v511
    %513 = vdwg.mxu0
    %v514 = vmax.f32 %v512, 0.0
    %516 = vrot.lane.b32.xlu0 %v514, 96
    %v517 = vpop.permute.xlu0 %516
    %vm518 = vcmask 269312
    %v519 = vsel %vm518, %v517, 0
    %v522 = vsel %vm286, %v45, 0
    %524 = vmatpush.msra.mxu0 0.0
    %525 = vmatpush.msra.mxu0 0.0
    %526 = vmatpush.msra.mxu0 0.0
    %527 = vmatpush.msra.mxu0 0.0
    %528 = vmatpush.msra.mxu0 0.0
    %529 = vmatpush.msra.mxu0 0.0
    %530 = vmatpush.msra.mxu0 0.0
    %531 = vmatpush.msra.mxu0 0.0
    %532 = vmatpush.msra.mxu0 0.0
    %533 = vmatpush.msra.mxu0 0.0
    %534 = vmatpush.msra.mxu0 0.0
    %v535 = vand.u32 %v522, 4294901760
    %536 = vmatpush.msra.mxu0 %v535
    %v537 = vand.u32 %v44, 4294901760
    %538 = vmatpush.msra.mxu0 %v537
    %v539 = vand.u32 %v43, 4294901760
    %540 = vmatpush.msra.mxu0 %v539
    %v541 = vand.u32 %v42, 4294901760
    %542 = vmatpush.msra.mxu0 %v541
    %v543 = vand.u32 %v41, 4294901760
    %544 = vmatpush.msra.mxu0 %v543
    %v545 = vand.u32 %v519, 4294901760
    %v546 = vsub.f32 %v519, %v545
    %v547 = vand.u32 %v546, 4294901760
    %v548 = vsub.f32 %v546, %v547
    %v549 = vand.u32 %v548, 4294901760
    %550 = vmatmul.f32.gmra.mxu0 %v549
    %v551 = vpop.f32.mrf.mxu0
    %v552 = vadd.f32 0.0, %v551
    %553 = vdwg.mxu0
    %554 = vmatpush.msra.mxu0 0.0
    %555 = vmatpush.msra.mxu0 0.0
    %556 = vmatpush.msra.mxu0 0.0
    %557 = vmatpush.msra.mxu0 0.0
    %558 = vmatpush.msra.mxu0 0.0
    %559 = vmatpush.msra.mxu0 0.0
    %560 = vmatpush.msra.mxu0 0.0
    %561 = vmatpush.msra.mxu0 0.0
    %562 = vmatpush.msra.mxu0 0.0
    %563 = vmatpush.msra.mxu0 0.0
    %564 = vmatpush.msra.mxu0 0.0
    %v565 = vand.u32 %v522, 4294901760
    %v566 = vsub.f32 %v522, %v565
    %v567 = vand.u32 %v566, 4294901760
    %v568 = vsub.f32 %v566, %v567
    %v569 = vand.u32 %v568, 4294901760
    %570 = vmatpush.msra.mxu0 %v569
    %v571 = vand.u32 %v44, 4294901760
    %v572 = vsub.f32 %v44, %v571
    %v573 = vand.u32 %v572, 4294901760
    %v574 = vsub.f32 %v572, %v573
    %v575 = vand.u32 %v574, 4294901760
    %576 = vmatpush.msra.mxu0 %v575
    %v577 = vand.u32 %v43, 4294901760
    %v578 = vsub.f32 %v43, %v577
    %v579 = vand.u32 %v578, 4294901760
    %v580 = vsub.f32 %v578, %v579
    %v581 = vand.u32 %v580, 4294901760
    %582 = vmatpush.msra.mxu0 %v581
    %v583 = vand.u32 %v42, 4294901760
    %v584 = vsub.f32 %v42, %v583
    %v585 = vand.u32 %v584, 4294901760
    %v586 = vsub.f32 %v584, %v585
    %v587 = vand.u32 %v586, 4294901760
    %588 = vmatpush.msra.mxu0 %v587
    %v589 = vand.u32 %v41, 4294901760
    %v590 = vsub.f32 %v41, %v589
    %v591 = vand.u32 %v590, 4294901760
    %v592 = vsub.f32 %v590, %v591
    %v593 = vand.u32 %v592, 4294901760
    %594 = vmatpush.msra.mxu0 %v593
    %v595 = vand.u32 %v519, 4294901760
    %596 = vmatmul.f32.gmra.mxu0 %v595
    %v597 = vpop.f32.mrf.mxu0
    %v598 = vadd.f32 %v552, %v597
    %599 = vdwg.mxu0
    %600 = vmatpush.msra.mxu0 0.0
    %601 = vmatpush.msra.mxu0 0.0
    %602 = vmatpush.msra.mxu0 0.0
    %603 = vmatpush.msra.mxu0 0.0
    %604 = vmatpush.msra.mxu0 0.0
    %605 = vmatpush.msra.mxu0 0.0
    %606 = vmatpush.msra.mxu0 0.0
    %607 = vmatpush.msra.mxu0 0.0
    %608 = vmatpush.msra.mxu0 0.0
    %609 = vmatpush.msra.mxu0 0.0
    %610 = vmatpush.msra.mxu0 0.0
    %v611 = vand.u32 %v522, 4294901760
    %v612 = vsub.f32 %v522, %v611
    %613 = vmatpush.msra.mxu0 %v612
    %v614 = vand.u32 %v44, 4294901760
    %v615 = vsub.f32 %v44, %v614
    %616 = vmatpush.msra.mxu0 %v615
    %v617 = vand.u32 %v43, 4294901760
    %v618 = vsub.f32 %v43, %v617
    %619 = vmatpush.msra.mxu0 %v618
    %v620 = vand.u32 %v42, 4294901760
    %v621 = vsub.f32 %v42, %v620
    %622 = vmatpush.msra.mxu0 %v621
    %v623 = vand.u32 %v41, 4294901760
    %v624 = vsub.f32 %v41, %v623
    %625 = vmatpush.msra.mxu0 %v624
    %v626 = vand.u32 %v519, 4294901760
    %v627 = vsub.f32 %v519, %v626
    %628 = vmatmul.f32.gmra.mxu0 %v627
    %v629 = vpop.f32.mrf.mxu0
    %v630 = vadd.f32 %v598, %v629
    %631 = vdwg.mxu0
    %632 = vmatpush.msra.mxu0 0.0
    %633 = vmatpush.msra.mxu0 0.0
    %634 = vmatpush.msra.mxu0 0.0
    %635 = vmatpush.msra.mxu0 0.0
    %636 = vmatpush.msra.mxu0 0.0
    %637 = vmatpush.msra.mxu0 0.0
    %638 = vmatpush.msra.mxu0 0.0
    %639 = vmatpush.msra.mxu0 0.0
    %640 = vmatpush.msra.mxu0 0.0
    %641 = vmatpush.msra.mxu0 0.0
    %642 = vmatpush.msra.mxu0 0.0
    %v643 = vand.u32 %v522, 4294901760
    %644 = vmatpush.msra.mxu0 %v643
    %v645 = vand.u32 %v44, 4294901760
    %646 = vmatpush.msra.mxu0 %v645
    %v647 = vand.u32 %v43, 4294901760
    %648 = vmatpush.msra.mxu0 %v647
    %v649 = vand.u32 %v42, 4294901760
    %650 = vmatpush.msra.mxu0 %v649
    %v651 = vand.u32 %v41, 4294901760
    %652 = vmatpush.msra.mxu0 %v651
    %v653 = vand.u32 %v519, 4294901760
    %v654 = vsub.f32 %v519, %v653
    %v655 = vand.u32 %v654, 4294901760
    %656 = vmatmul.f32.gmra.mxu0 %v655
    %v657 = vpop.f32.mrf.mxu0
    %v658 = vadd.f32 %v630, %v657
    %659 = vdwg.mxu0
    %660 = vmatpush.msra.mxu0 0.0
    %661 = vmatpush.msra.mxu0 0.0
    %662 = vmatpush.msra.mxu0 0.0
    %663 = vmatpush.msra.mxu0 0.0
    %664 = vmatpush.msra.mxu0 0.0
    %665 = vmatpush.msra.mxu0 0.0
    %666 = vmatpush.msra.mxu0 0.0
    %667 = vmatpush.msra.mxu0 0.0
    %668 = vmatpush.msra.mxu0 0.0
    %669 = vmatpush.msra.mxu0 0.0
    %670 = vmatpush.msra.mxu0 0.0
    %v671 = vand.u32 %v522, 4294901760
    %v672 = vsub.f32 %v522, %v671
    %v673 = vand.u32 %v672, 4294901760
    %674 = vmatpush.msra.mxu0 %v673
    %v675 = vand.u32 %v44, 4294901760
    %v676 = vsub.f32 %v44, %v675
    %v677 = vand.u32 %v676, 4294901760
    %678 = vmatpush.msra.mxu0 %v677
    %v679 = vand.u32 %v43, 4294901760
    %v680 = vsub.f32 %v43, %v679
    %v681 = vand.u32 %v680, 4294901760
    %682 = vmatpush.msra.mxu0 %v681
    %v683 = vand.u32 %v42, 4294901760
    %v684 = vsub.f32 %v42, %v683
    %v685 = vand.u32 %v684, 4294901760
    %686 = vmatpush.msra.mxu0 %v685
    %v687 = vand.u32 %v41, 4294901760
    %v688 = vsub.f32 %v41, %v687
    %v689 = vand.u32 %v688, 4294901760
    %690 = vmatpush.msra.mxu0 %v689
    %v691 = vand.u32 %v519, 4294901760
    %692 = vmatmul.f32.gmra.mxu0 %v691
    %v693 = vpop.f32.mrf.mxu0
    %v694 = vadd.f32 %v658, %v693
    %695 = vdwg.mxu0
    %696 = vmatpush.msra.mxu0 0.0
    %697 = vmatpush.msra.mxu0 0.0
    %698 = vmatpush.msra.mxu0 0.0
    %699 = vmatpush.msra.mxu0 0.0
    %700 = vmatpush.msra.mxu0 0.0
    %701 = vmatpush.msra.mxu0 0.0
    %702 = vmatpush.msra.mxu0 0.0
    %703 = vmatpush.msra.mxu0 0.0
    %704 = vmatpush.msra.mxu0 0.0
    %705 = vmatpush.msra.mxu0 0.0
    %706 = vmatpush.msra.mxu0 0.0
    %v707 = vand.u32 %v522, 4294901760
    %708 = vmatpush.msra.mxu0 %v707
    %v709 = vand.u32 %v44, 4294901760
    %710 = vmatpush.msra.mxu0 %v709
    %v711 = vand.u32 %v43, 4294901760
    %712 = vmatpush.msra.mxu0 %v711
    %v713 = vand.u32 %v42, 4294901760
    %714 = vmatpush.msra.mxu0 %v713
    %v715 = vand.u32 %v41, 4294901760
    %716 = vmatpush.msra.mxu0 %v715
    %v717 = vand.u32 %v519, 4294901760
    %718 = vmatmul.f32.gmra.mxu0 %v717
    %v719 = vpop.f32.mrf.mxu0
    %v720 = vadd.f32 %v694, %v719
    %721 = vdwg.mxu0
    %722 = vst [vmem:[%s2] sm:$0x3] 0.0
    %vm723 = vcmask 254976
    %724 = vst.msk [vmem:[%s2] sm:$0x3] %vm723, %v512
    %726 = vrot.lane.b32.xlu0 %v720, 32
    %v727 = vpop.permute.xlu0 %726
    %vm729 = vcmask 279808
    %730 = vst.msk [vmem:[%s2] sm:$0x3] %vm729, %v727
    // Predicated region
    $region14: #{ai_brain_forward.1} parent=1 // pred_check
      _
    $region15: #{ai_brain_forward.1} parent=1 // pred_check_branch
      %732 = sbr.rel (0) target = $region17
    $region16: #{ai_brain_forward.1} parent=1 // pred_region
      _
    $region17: #{ai_brain_forward.1} parent=1 // pred_fallthru
      _
    // Predicated region
    $region18: #{ai_brain_forward.1} parent=1 // pred_check
      _
    $region19: #{ai_brain_forward.1} parent=1 // pred_check_branch
      %734 = sbr.rel (0) target = $region21
    $region20: #{ai_brain_forward.1} parent=1 // pred_region
      _
    $region21: #{ai_brain_forward.1} parent=1 // pred_fallthru
      _
    %735 = vsyncpa [#allocation3], 1

</llo_original>
